<compile_context>
chip_gen: v7x
topology: tpu7x:2x2x1
jax: 0.10.0
libtpu: 0.0.40
codegen_flags: <defaults>
</compile_context>

<pallas_src>
import functools

import jax
import jax.numpy as jnp
from jax.experimental import pallas as pl
from jax.experimental.pallas import tpu as pltpu

LANE = 128
MIB = 1024 * 1024


def _round_up(x, m):
    return ((x + m - 1) // m) * m


def _pad2d(a, rows, cols):
    pr, pc = rows - a.shape[0], cols - a.shape[1]
    if pr == 0 and pc == 0:
        return a  # no-op: no XLA pad inserted when already aligned
    return jnp.pad(a, ((0, pr), (0, pc)))


def encoder_kernel(x_ref, w1_ref, b1_ref, w2_ref, b2_ref, w3_ref, b3_ref, o_ref):
    # Cast x per-tile in VMEM (wrapper never materializes a bf16 copy in HBM).
    x = x_ref[...].astype(jnp.bfloat16)

    # Three fused matmul + bias + ReLU stages; bf16 operands on the MXU,
    # f32 accumulation throughout.
    h = jnp.dot(x, w1_ref[...], preferred_element_type=jnp.float32)
    h = jnp.maximum(h + b1_ref[...], 0.0).astype(jnp.bfloat16)

    h = jnp.dot(h, w2_ref[...], preferred_element_type=jnp.float32)
    h = jnp.maximum(h + b2_ref[...], 0.0).astype(jnp.bfloat16)

    h = jnp.dot(h, w3_ref[...], preferred_element_type=jnp.float32)
    h = jnp.maximum(h + b3_ref[...], 0.0)

    o_ref[...] = h.astype(o_ref.dtype)


def _vmem_footprint_bytes(tile_b, in_p, h1_p, h2_p, hid_p, x_bytes, out_bytes,
                          weight_buffers):
    """Estimated per-step VMEM bytes for the chosen tiling."""
    x_tile = 2 * tile_b * in_p * x_bytes                  # x tile, double-buffered
    out_tile = 2 * tile_b * hid_p * out_bytes             # out tile, double-buffered
    w = weight_buffers * 2 * (in_p * h1_p + h1_p * h2_p + h2_p * hid_p)  # bf16
    b = weight_buffers * 4 * (h1_p + h2_p + hid_p)        # f32 biases
    interm = 4 * tile_b * (h1_p + h2_p)                   # f32 intermediates (scratch)
    return x_tile + out_tile + w + b + interm


@functools.partial(
    jax.jit, static_argnames=("tile_b", "out_dtype", "single_buffer_weights"))
def encoder_forward(x, params, *, tile_b=None, out_dtype=jnp.float32,
                    single_buffer_weights=True):
    """x: (B, input_size). params: dict of w1,b1,w2,b2,w3,b3.

    Weights are (in, out) (pre-transposed vs. PyTorch); biases are (1, out).
    Returns (B, hidden_size) in out_dtype (default float32).
    """
    B, in_size = x.shape
    h1 = params["w1"].shape[1]
    h2 = params["w2"].shape[1]
    hidden = params["w3"].shape[1]

    # --- pad feature dims to lane multiples (128) for lane-dense layout -----
    in_p = _round_up(in_size, LANE)
    h1_p = _round_up(h1, LANE)
    h2_p = _round_up(h2, LANE)
    hid_p = _round_up(hidden, LANE)

    # Weights: bf16 (MXU throughput + halved HBM->VMEM traffic). Biases stay f32
    # (added onto the f32 accumulator); padded lanes are zero, so padded features
    # come out of each ReLU as exact zeros.
    w1 = _pad2d(params["w1"].astype(jnp.bfloat16), in_p, h1_p)
    w2 = _pad2d(params["w2"].astype(jnp.bfloat16), h1_p, h2_p)
    w3 = _pad2d(params["w3"].astype(jnp.bfloat16), h2_p, hid_p)
    b1 = _pad2d(params["b1"].astype(jnp.float32), 1, h1_p)
    b2 = _pad2d(params["b2"].astype(jnp.float32), 1, h2_p)
    b3 = _pad2d(params["b3"].astype(jnp.float32), 1, hid_p)

    # --- VMEM budgeting (generation-aware) ----------------------------------
    try:
        vmem_cap = int(pltpu.get_tpu_info().vmem_capacity_bytes)
    except Exception:
        vmem_cap = 64 * MIB  # conservative default (v7x per-TC capacity)
    # Scoped-VMEM ceiling: leave room for Mosaic internal scratch.
    vmem_ceiling = min(max(vmem_cap - 24 * MIB, 16 * MIB), 100 * MIB)

    x_bytes = jnp.dtype(x.dtype).itemsize
    out_bytes = jnp.dtype(out_dtype).itemsize
    weight_buffers = 1 if single_buffer_weights else 2

    # --- batch tiling --------------------------------------------------------
    if tile_b is None:
        if B <= 256:
            # Single grid step: the grid is a serial loop on one TC (v5e/v6e),
            # so splitting a small batch only pays ~0.35us/step overhead.
            tile_b = _round_up(max(B, 1), 16)
        else:
            # Largest of 1024/512/256 rows that fits the VMEM budget; >=256 keeps
            # the 256-wide MXU (v6e/v7x) well filled.
            tile_b = 256
            for cand in (1024, 512):
                fits = _vmem_footprint_bytes(
                    cand, in_p, h1_p, h2_p, hid_p, x_bytes, out_bytes,
                    weight_buffers) <= vmem_ceiling - 4 * MIB
                if B >= cand and fits:
                    tile_b = cand
                    break
    B_p = _round_up(B, tile_b)

    # Only a real pad op when shapes are actually misaligned; x keeps its dtype.
    x_p = _pad2d(x, B_p, in_p)

    footprint = _vmem_footprint_bytes(tile_b, in_p, h1_p, h2_p, hid_p,
                                      x_bytes, out_bytes, weight_buffers)
    vmem_limit = int(max(16 * MIB, min(footprint + 8 * MIB, vmem_ceiling)))

    grid = (B_p // tile_b,)

    # Weights/biases use a constant index_map (resident across grid steps);
    # single-buffer them to halve their VMEM footprint.
    def const_spec(shape):
        if single_buffer_weights:
            return pl.BlockSpec(shape, lambda i: (0, 0),
                                pipeline_mode=pl.Buffered(1))
        return pl.BlockSpec(shape, lambda i: (0, 0))

    in_specs = [
        pl.BlockSpec((tile_b, in_p), lambda i: (i, 0)),
        const_spec((in_p, h1_p)),
        const_spec((1, h1_p)),
        const_spec((h1_p, h2_p)),
        const_spec((1, h2_p)),
        const_spec((h2_p, hid_p)),
        const_spec((1, hid_p)),
    ]
    out_spec = pl.BlockSpec((tile_b, hid_p), lambda i: (i, 0))

    # Advisory cost estimate so XLA schedules the custom call sensibly.
    flops = 2 * B_p * (in_p * h1_p + h1_p * h2_p + h2_p * hid_p)
    bytes_accessed = (
        B_p * in_p * x_bytes
        + (w1.size + w2.size + w3.size) * 2
        + (b1.size + b2.size + b3.size) * 4
        + B_p * hid_p * out_bytes
    )
    cost = pl.CostEstimate(flops=flops, transcendentals=0,
                           bytes_accessed=bytes_accessed)

    out_p = pl.pallas_call(
        encoder_kernel,
        out_shape=jax.ShapeDtypeStruct((B_p, hid_p), out_dtype),
        grid_spec=pltpu.PrefetchScalarGridSpec(
            num_scalar_prefetch=0,
            grid=grid,
            in_specs=in_specs,
            out_specs=out_spec,
        ),
        compiler_params=pltpu.CompilerParams(
            # batch axis shards across both TensorCores on v7x
            dimension_semantics=("parallel",),
            vmem_limit_bytes=vmem_limit,
        ),
        cost_estimate=cost,
    )(x_p, w1, b1, w2, b2, w3, b3)

    # Strip padding only if any was added (no-op / eliminated otherwise).
    if B_p != B or hid_p != hidden:
        return out_p[:B, :hidden]
    return out_p


def init_encoder_params(key, input_size, hidden_size, dtype=jnp.float32):
    """Deterministic init mimicking nn.Linear default (uniform +-1/sqrt(fan_in)).

    Weights are stored transposed relative to PyTorch: (in, out).
    """
    dims = [
        (input_size, input_size // 2),
        (input_size // 2, input_size // 4),
        (input_size // 4, hidden_size),
    ]
    params = {}
    for idx, (fan_in, fan_out) in enumerate(dims, start=1):
        key, kw, kb = jax.random.split(key, 3)
        bound = 1.0 / jnp.sqrt(jnp.asarray(fan_in, dtype))
        params[f"w{idx}"] = jax.random.uniform(
            kw, (fan_in, fan_out), dtype, minval=-bound, maxval=bound)
        params[f"b{idx}"] = jax.random.uniform(
            kb, (1, fan_out), dtype, minval=-bound, maxval=bound)
    return params


def encoder_ref(x, params):
    """Reference emulating the kernel's bf16-operand / f32-accumulate compute."""
    def layer(h, w, b):
        acc = jnp.dot(h.astype(jnp.bfloat16), w.astype(jnp.bfloat16),
                      preferred_element_type=jnp.float32)
        return jnp.maximum(acc + b.astype(jnp.float32), 0.0)
    h = layer(x, params["w1"], params["b1"])
    h = layer(h.astype(jnp.bfloat16), params["w2"], params["b2"])
    h = layer(h.astype(jnp.bfloat16), params["w3"], params["b3"])
    return h


if __name__ == "__main__":
    key = jax.random.PRNGKey(0)
    kx, kp = jax.random.split(key)

    batch = 64            # B <= 256 -> single grid step, tile_b = 64
    input_size = 64       # -> fc1: 32, fc2: 16
    hidden_size = 32

    x = jax.random.normal(kx, (batch, input_size), dtype=jnp.float32)
    params = init_encoder_params(kp, input_size, hidden_size)

    try:
        out = encoder_forward(x, params)
    except Exception:
        # Fallback if this JAX version rejects single-buffered (Buffered(1))
        # BlockSpecs: use default double-buffering for the weight blocks.
        out = encoder_forward(x, params, single_buffer_weights=False)
    out = jax.block_until_ready(out)

    ref = encoder_ref(x, params)
    assert out.shape == (batch, hidden_size)
    assert jnp.allclose(out, ref, atol=1e-2, rtol=1e-2), (
        float(jnp.max(jnp.abs(out - ref))))

    print("KERNEL_OK")
</pallas_src>

<mosaic_0001>
module attributes {stable_mosaic.version = 11 : i64} {
  func.func @encoder_kernel(%arg0: i32, %arg1: memref<64x128xf32, #tpu.memory_space<vmem>>, %arg2: memref<128x128xbf16, #tpu.memory_space<vmem>>, %arg3: memref<1x128xf32, #tpu.memory_space<vmem>>, %arg4: memref<128x128xbf16, #tpu.memory_space<vmem>>, %arg5: memref<1x128xf32, #tpu.memory_space<vmem>>, %arg6: memref<128x128xbf16, #tpu.memory_space<vmem>>, %arg7: memref<1x128xf32, #tpu.memory_space<vmem>>, %arg8: memref<64x128xf32, #tpu.memory_space<vmem>>) attributes {dimension_semantics = [#tpu.dimension_semantics<parallel>], iteration_bounds = array<i64: 1>, scalar_prefetch = 0 : i64, scratch_operands = 0 : i64, tpu.core_type = #tpu.core_type<tc>, window_params = [{transform_indices = @transform_0, window_bounds = array<i64: 64, 128>}, {pipeline_mode = #tpu.pipeline_mode<synchronous>, transform_indices = @transform_1, window_bounds = array<i64: 128, 128>}, {pipeline_mode = #tpu.pipeline_mode<synchronous>, transform_indices = @transform_2, window_bounds = array<i64: 1, 128>}, {pipeline_mode = #tpu.pipeline_mode<synchronous>, transform_indices = @transform_3, window_bounds = array<i64: 128, 128>}, {pipeline_mode = #tpu.pipeline_mode<synchronous>, transform_indices = @transform_4, window_bounds = array<i64: 1, 128>}, {pipeline_mode = #tpu.pipeline_mode<synchronous>, transform_indices = @transform_5, window_bounds = array<i64: 128, 128>}, {pipeline_mode = #tpu.pipeline_mode<synchronous>, transform_indices = @transform_6, window_bounds = array<i64: 1, 128>}, {transform_indices = @transform_7, window_bounds = array<i64: 64, 128>}]} {
    %c0 = arith.constant 0 : index
    %c0_0 = arith.constant 0 : index
    %0 = vector.load %arg1[%c0, %c0_0] : memref<64x128xf32, #tpu.memory_space<vmem>>, vector<64x128xf32>
    %1 = arith.truncf %0 : vector<64x128xf32> to vector<64x128xbf16>
    %c0_1 = arith.constant 0 : index
    %c0_2 = arith.constant 0 : index
    %2 = vector.load %arg2[%c0_1, %c0_2] : memref<128x128xbf16, #tpu.memory_space<vmem>>, vector<128x128xbf16>
    %cst = arith.constant dense<0.000000e+00> : vector<64x128xf32>
    %3 = tpu.matmul %1, %2, %cst {dimension_numbers = #tpu.dot_dimension_numbers<[1], [0], [0], [1], [0, 0, 1, 1], [], []>} : vector<64x128xbf16>, vector<128x128xbf16>, vector<64x128xf32> -> vector<64x128xf32>
    %c0_3 = arith.constant 0 : index
    %c0_4 = arith.constant 0 : index
    %4 = vector.load %arg3[%c0_3, %c0_4] : memref<1x128xf32, #tpu.memory_space<vmem>>, vector<1x128xf32>
    %5 = vector.broadcast %4 : vector<1x128xf32> to vector<64x128xf32>
    %6 = arith.addf %3, %5 : vector<64x128xf32>
    %cst_5 = arith.constant 0.000000e+00 : f32
    %7 = vector.broadcast %cst_5 : f32 to vector<64x128xf32>
    %8 = arith.maximumf %6, %7 : vector<64x128xf32>
    %9 = arith.truncf %8 : vector<64x128xf32> to vector<64x128xbf16>
    %c0_6 = arith.constant 0 : index
    %c0_7 = arith.constant 0 : index
    %10 = vector.load %arg4[%c0_6, %c0_7] : memref<128x128xbf16, #tpu.memory_space<vmem>>, vector<128x128xbf16>
    %cst_8 = arith.constant dense<0.000000e+00> : vector<64x128xf32>
    %11 = tpu.matmul %9, %10, %cst_8 {dimension_numbers = #tpu.dot_dimension_numbers<[1], [0], [0], [1], [0, 0, 1, 1], [], []>} : vector<64x128xbf16>, vector<128x128xbf16>, vector<64x128xf32> -> vector<64x128xf32>
    %c0_9 = arith.constant 0 : index
    %c0_10 = arith.constant 0 : index
    %12 = vector.load %arg5[%c0_9, %c0_10] : memref<1x128xf32, #tpu.memory_space<vmem>>, vector<1x128xf32>
    %13 = vector.broadcast %12 : vector<1x128xf32> to vector<64x128xf32>
    %14 = arith.addf %11, %13 : vector<64x128xf32>
    %cst_11 = arith.constant 0.000000e+00 : f32
    %15 = vector.broadcast %cst_11 : f32 to vector<64x128xf32>
    %16 = arith.maximumf %14, %15 : vector<64x128xf32>
    %17 = arith.truncf %16 : vector<64x128xf32> to vector<64x128xbf16>
    %c0_12 = arith.constant 0 : index
    %c0_13 = arith.constant 0 : index
    %18 = vector.load %arg6[%c0_12, %c0_13] : memref<128x128xbf16, #tpu.memory_space<vmem>>, vector<128x128xbf16>
    %cst_14 = arith.constant dense<0.000000e+00> : vector<64x128xf32>
    %19 = tpu.matmul %17, %18, %cst_14 {dimension_numbers = #tpu.dot_dimension_numbers<[1], [0], [0], [1], [0, 0, 1, 1], [], []>} : vector<64x128xbf16>, vector<128x128xbf16>, vector<64x128xf32> -> vector<64x128xf32>
    %c0_15 = arith.constant 0 : index
    %c0_16 = arith.constant 0 : index
    %20 = vector.load %arg7[%c0_15, %c0_16] : memref<1x128xf32, #tpu.memory_space<vmem>>, vector<1x128xf32>
    %21 = vector.broadcast %20 : vector<1x128xf32> to vector<64x128xf32>
    %22 = arith.addf %19, %21 : vector<64x128xf32>
    %cst_17 = arith.constant 0.000000e+00 : f32
    %23 = vector.broadcast %cst_17 : f32 to vector<64x128xf32>
    %24 = arith.maximumf %22, %23 : vector<64x128xf32>
    %c0_18 = arith.constant 0 : index
    %c0_19 = arith.constant 0 : index
    %25 = vector.load %arg8[%c0_18, %c0_19] : memref<64x128xf32, #tpu.memory_space<vmem>>, vector<64x128xf32>
    tpu.vector_store %arg8[%c0_18, %c0_19], %24 {strides = array<i32>} : memref<64x128xf32, #tpu.memory_space<vmem>>, vector<64x128xf32>,
    return
  }
  func.func @transform_0(%arg0: i32) -> (i32, i32) {
    %c0_i32 = arith.constant 0 : i32
    %c0_i32_0 = arith.constant 0 : i32
    return %arg0, %c0_i32 : i32, i32
  }
  func.func @transform_1(%arg0: i32) -> (i32, i32) {
    %c0_i32 = arith.constant 0 : i32
    %c0_i32_0 = arith.constant 0 : i32
    %c0_i32_1 = arith.constant 0 : i32
    return %c0_i32, %c0_i32_0 : i32, i32
  }
  func.func @transform_2(%arg0: i32) -> (i32, i32) {
    %c0_i32 = arith.constant 0 : i32
    %c0_i32_0 = arith.constant 0 : i32
    %c0_i32_1 = arith.constant 0 : i32
    return %c0_i32, %c0_i32_0 : i32, i32
  }
  func.func @transform_3(%arg0: i32) -> (i32, i32) {
    %c0_i32 = arith.constant 0 : i32
    %c0_i32_0 = arith.constant 0 : i32
    %c0_i32_1 = arith.constant 0 : i32
    return %c0_i32, %c0_i32_0 : i32, i32
  }
  func.func @transform_4(%arg0: i32) -> (i32, i32) {
    %c0_i32 = arith.constant 0 : i32
    %c0_i32_0 = arith.constant 0 : i32
    %c0_i32_1 = arith.constant 0 : i32
    return %c0_i32, %c0_i32_0 : i32, i32
  }
  func.func @transform_5(%arg0: i32) -> (i32, i32) {
    %c0_i32 = arith.constant 0 : i32
    %c0_i32_0 = arith.constant 0 : i32
    %c0_i32_1 = arith.constant 0 : i32
    return %c0_i32, %c0_i32_0 : i32, i32
  }
  func.func @transform_6(%arg0: i32) -> (i32, i32) {
    %c0_i32 = arith.constant 0 : i32
    %c0_i32_0 = arith.constant 0 : i32
    %c0_i32_1 = arith.constant 0 : i32
    return %c0_i32, %c0_i32_0 : i32, i32
  }
  func.func @transform_7(%arg0: i32) -> (i32, i32) {
    %c0_i32 = arith.constant 0 : i32
    %c0_i32_0 = arith.constant 0 : i32
    return %arg0, %c0_i32 : i32, i32
  }
}

module attributes {stable_mosaic.version = 11 : i64} {
  func.func @encoder_kernel(%arg0: i32, %arg1: memref<64x128xf32, #tpu.memory_space<vmem>>, %arg2: memref<128x128xbf16, #tpu.memory_space<vmem>>, %arg3: memref<1x128xf32, #tpu.memory_space<vmem>>, %arg4: memref<128x128xbf16, #tpu.memory_space<vmem>>, %arg5: memref<1x128xf32, #tpu.memory_space<vmem>>, %arg6: memref<128x128xbf16, #tpu.memory_space<vmem>>, %arg7: memref<1x128xf32, #tpu.memory_space<vmem>>, %arg8: memref<64x128xf32, #tpu.memory_space<vmem>>) attributes {dimension_semantics = [#tpu.dimension_semantics<parallel>], iteration_bounds = array<i64: 1>, scalar_prefetch = 0 : i64, scratch_operands = 0 : i64, tpu.core_type = #tpu.core_type<tc>, window_params = [{transform_indices = @transform_0, window_bounds = array<i64: 64, 128>}, {pipeline_mode = #tpu.pipeline_mode<synchronous>, transform_indices = @transform_1, window_bounds = array<i64: 128, 128>}, {pipeline_mode = #tpu.pipeline_mode<synchronous>, transform_indices = @transform_2, window_bounds = array<i64: 1, 128>}, {pipeline_mode = #tpu.pipeline_mode<synchronous>, transform_indices = @transform_3, window_bounds = array<i64: 128, 128>}, {pipeline_mode = #tpu.pipeline_mode<synchronous>, transform_indices = @transform_4, window_bounds = array<i64: 1, 128>}, {pipeline_mode = #tpu.pipeline_mode<synchronous>, transform_indices = @transform_5, window_bounds = array<i64: 128, 128>}, {pipeline_mode = #tpu.pipeline_mode<synchronous>, transform_indices = @transform_6, window_bounds = array<i64: 1, 128>}, {transform_indices = @transform_7, window_bounds = array<i64: 64, 128>}]} {
    %c0 = arith.constant 0 : index
    %c0_0 = arith.constant 0 : index
    %0 = vector.load %arg1[%c0, %c0_0] : memref<64x128xf32, #tpu.memory_space<vmem>>, vector<64x128xf32>
    %1 = arith.truncf %0 : vector<64x128xf32> to vector<64x128xbf16>
    %c0_1 = arith.constant 0 : index
    %c0_2 = arith.constant 0 : index
    %2 = vector.load %arg2[%c0_1, %c0_2] : memref<128x128xbf16, #tpu.memory_space<vmem>>, vector<128x128xbf16>
    %cst = arith.constant dense<0.000000e+00> : vector<64x128xf32>
    %3 = tpu.matmul %1, %2, %cst {dimension_numbers = #tpu.dot_dimension_numbers<[1], [0], [0], [1], [0, 0, 1, 1], [], []>} : vector<64x128xbf16>, vector<128x128xbf16>, vector<64x128xf32> -> vector<64x128xf32>
    %c0_3 = arith.constant 0 : index
    %c0_4 = arith.constant 0 : index
    %4 = vector.load %arg3[%c0_3, %c0_4] : memref<1x128xf32, #tpu.memory_space<vmem>>, vector<1x128xf32>
    %5 = vector.broadcast %4 : vector<1x128xf32> to vector<64x128xf32>
    %6 = arith.addf %3, %5 : vector<64x128xf32>
    %cst_5 = arith.constant 0.000000e+00 : f32
    %7 = vector.broadcast %cst_5 : f32 to vector<64x128xf32>
    %8 = arith.maximumf %6, %7 : vector<64x128xf32>
    %9 = arith.truncf %8 : vector<64x128xf32> to vector<64x128xbf16>
    %c0_6 = arith.constant 0 : index
    %c0_7 = arith.constant 0 : index
    %10 = vector.load %arg4[%c0_6, %c0_7] : memref<128x128xbf16, #tpu.memory_space<vmem>>, vector<128x128xbf16>
    %cst_8 = arith.constant dense<0.000000e+00> : vector<64x128xf32>
    %11 = tpu.matmul %9, %10, %cst_8 {dimension_numbers = #tpu.dot_dimension_numbers<[1], [0], [0], [1], [0, 0, 1, 1], [], []>} : vector<64x128xbf16>, vector<128x128xbf16>, vector<64x128xf32> -> vector<64x128xf32>
    %c0_9 = arith.constant 0 : index
    %c0_10 = arith.constant 0 : index
    %12 = vector.load %arg5[%c0_9, %c0_10] : memref<1x128xf32, #tpu.memory_space<vmem>>, vector<1x128xf32>
    %13 = vector.broadcast %12 : vector<1x128xf32> to vector<64x128xf32>
    %14 = arith.addf %11, %13 : vector<64x128xf32>
    %cst_11 = arith.constant 0.000000e+00 : f32
    %15 = vector.broadcast %cst_11 : f32 to vector<64x128xf32>
    %16 = arith.maximumf %14, %15 : vector<64x128xf32>
    %17 = arith.truncf %16 : vector<64x128xf32> to vector<64x128xbf16>
    %c0_12 = arith.constant 0 : index
    %c0_13 = arith.constant 0 : index
    %18 = vector.load %arg6[%c0_12, %c0_13] : memref<128x128xbf16, #tpu.memory_space<vmem>>, vector<128x128xbf16>
    %cst_14 = arith.constant dense<0.000000e+00> : vector<64x128xf32>
    %19 = tpu.matmul %17, %18, %cst_14 {dimension_numbers = #tpu.dot_dimension_numbers<[1], [0], [0], [1], [0, 0, 1, 1], [], []>} : vector<64x128xbf16>, vector<128x128xbf16>, vector<64x128xf32> -> vector<64x128xf32>
    %c0_15 = arith.constant 0 : index
    %c0_16 = arith.constant 0 : index
    %20 = vector.load %arg7[%c0_15, %c0_16] : memref<1x128xf32, #tpu.memory_space<vmem>>, vector<1x128xf32>
    %21 = vector.broadcast %20 : vector<1x128xf32> to vector<64x128xf32>
    %22 = arith.addf %19, %21 : vector<64x128xf32>
    %cst_17 = arith.constant 0.000000e+00 : f32
    %23 = vector.broadcast %cst_17 : f32 to vector<64x128xf32>
    %24 = arith.maximumf %22, %23 : vector<64x128xf32>
    %c0_18 = arith.constant 0 : index
    %c0_19 = arith.constant 0 : index
    %25 = vector.load %arg8[%c0_18, %c0_19] : memref<64x128xf32, #tpu.memory_space<vmem>>, vector<64x128xf32>
    tpu.vector_store %arg8[%c0_18, %c0_19], %24 {strides = array<i32>} : memref<64x128xf32, #tpu.memory_space<vmem>>, vector<64x128xf32>,
    return
  }
  func.func @transform_0(%arg0: i32) -> (i32, i32) {
    %c0_i32 = arith.constant 0 : i32
    %c0_i32_0 = arith.constant 0 : i32
    return %arg0, %c0_i32 : i32, i32
  }
  func.func @transform_1(%arg0: i32) -> (i32, i32) {
    %c0_i32 = arith.constant 0 : i32
    %c0_i32_0 = arith.constant 0 : i32
    %c0_i32_1 = arith.constant 0 : i32
    return %c0_i32, %c0_i32_0 : i32, i32
  }
  func.func @transform_2(%arg0: i32) -> (i32, i32) {
    %c0_i32 = arith.constant 0 : i32
    %c0_i32_0 = arith.constant 0 : i32
    %c0_i32_1 = arith.constant 0 : i32
    return %c0_i32, %c0_i32_0 : i32, i32
  }
  func.func @transform_3(%arg0: i32) -> (i32, i32) {
    %c0_i32 = arith.constant 0 : i32
    %c0_i32_0 = arith.constant 0 : i32
    %c0_i32_1 = arith.constant 0 : i32
    return %c0_i32, %c0_i32_0 : i32, i32
  }
  func.func @transform_4(%arg0: i32) -> (i32, i32) {
    %c0_i32 = arith.constant 0 : i32
    %c0_i32_0 = arith.constant 0 : i32
    %c0_i32_1 = arith.constant 0 : i32
    return %c0_i32, %c0_i32_0 : i32, i32
  }
  func.func @transform_5(%arg0: i32) -> (i32, i32) {
    %c0_i32 = arith.constant 0 : i32
    %c0_i32_0 = arith.constant 0 : i32
    %c0_i32_1 = arith.constant 0 : i32
    return %c0_i32, %c0_i32_0 : i32, i32
  }
  func.func @transform_6(%arg0: i32) -> (i32, i32) {
    %c0_i32 = arith.constant 0 : i32
    %c0_i32_0 = arith.constant 0 : i32
    %c0_i32_1 = arith.constant 0 : i32
    return %c0_i32, %c0_i32_0 : i32, i32
  }
  func.func @transform_7(%arg0: i32) -> (i32, i32) {
    %c0_i32 = arith.constant 0 : i32
    %c0_i32_0 = arith.constant 0 : i32
    return %arg0, %c0_i32 : i32, i32
  }
}

</mosaic_0001>

<llo_original>
// kernel: encoder_forward.1
$region0: #{encoder_forward.1}
  #allocation0 [shape = 'u32[]', space=smem, size = 0x4, offset = 0x4, fixed_abs, tag = 'smem constant byte address 0x4 - core index']
  #allocation1 [shape = 'u32[144,128]{1,0:T(1,128)}', space=vmem, size = 0x12000, scoped, tag = 'internal scratch']
  %s0 = inlined_call_operand.vmem [shape: f32[64,128], index: 0, kind: input, shape index: {}]
  %s1 = inlined_call_operand.vmem [shape: bf16[128,128], index: 1, kind: input, shape index: {}]
  %s2 = inlined_call_operand.vmem [shape: f32[1,128], index: 2, kind: input, shape index: {}]
  %s3 = inlined_call_operand.vmem [shape: bf16[128,128], index: 3, kind: input, shape index: {}]
  %s4 = inlined_call_operand.vmem [shape: f32[1,128], index: 4, kind: input, shape index: {}]
  %s5 = inlined_call_operand.vmem [shape: bf16[128,128], index: 5, kind: input, shape index: {}]
  %s6 = inlined_call_operand.vmem [shape: f32[1,128], index: 6, kind: input, shape index: {}]
  %s7 = inlined_call_operand.vmem [shape: f32[64,128], index: 7, kind: output, shape index: {}]
  %s8 = sld [smem:[#allocation0]]
  $region38: #{encoder_forward.1} parent=0
    _
  %s10 = ssub.s32 1, %s8
  %s11 = scalar_select 0, %s10, %s8
  // Predicated region
  $region2: #{encoder_forward.1} parent=0 // pred_check
    _
  $region3: #{encoder_forward.1} parent=0 // pred_check_branch
    %13 = sbr.rel (0) target = $region5
  $region4: #{encoder_forward.1} parent=0 // pred_region
    _
  $region5: #{encoder_forward.1} parent=0 // pred_fallthru
    _
  // Predicated region
  $region6: #{encoder_forward.1} parent=0 // pred_check
    _
  $region7: #{encoder_forward.1} parent=0 // pred_check_branch
    %15 = sbr.rel (0) target = $region9
  $region8: #{encoder_forward.1} parent=0 // pred_region
    _
  $region9: #{encoder_forward.1} parent=0 // pred_fallthru
    _
  // Predicated region
  $region10: #{encoder_forward.1} parent=0 // pred_check
    _
  $region11: #{encoder_forward.1} parent=0 // pred_check_branch
    %17 = sbr.rel (0) target = $region13
  $region12: #{encoder_forward.1} parent=0 // pred_region
    _
  $region13: #{encoder_forward.1} parent=0 // pred_fallthru
    _
  // Predicated region
  $region14: #{encoder_forward.1} parent=0 // pred_check
    _
  $region15: #{encoder_forward.1} parent=0 // pred_check_branch
    %19 = sbr.rel (0) target = $region17
  $region16: #{encoder_forward.1} parent=0 // pred_region
    _
  $region17: #{encoder_forward.1} parent=0 // pred_fallthru
    _
  // Predicated region
  $region18: #{encoder_forward.1} parent=0 // pred_check
    _
  $region19: #{encoder_forward.1} parent=0 // pred_check_branch
    %21 = sbr.rel (0) target = $region21
  $region20: #{encoder_forward.1} parent=0 // pred_region
    _
  $region21: #{encoder_forward.1} parent=0 // pred_fallthru
    _
  // Predicated region
  $region22: #{encoder_forward.1} parent=0 // pred_check
    _
  $region23: #{encoder_forward.1} parent=0 // pred_check_branch
    %23 = sbr.rel (0) target = $region25
  $region24: #{encoder_forward.1} parent=0 // pred_region
    _
  $region25: #{encoder_forward.1} parent=0 // pred_fallthru
    _
  // Predicated region
  $region26: #{encoder_forward.1} parent=0 // pred_check
    _
  $region27: #{encoder_forward.1} parent=0 // pred_check_branch
    %25 = sbr.rel (0) target = $region29
  $region28: #{encoder_forward.1} parent=0 // pred_region
    _
  $region29: #{encoder_forward.1} parent=0 // pred_fallthru
    _
  %v27 = vld [vmem:[%s0] sm:$0xff]
  %v28 = vld [vmem:[%s0 + $0x8] sm:$0xff]
  %v29 = vld [vmem:[%s0 + $0x10] sm:$0xff]
  %v30 = vld [vmem:[%s0 + $0x18] sm:$0xff]
  %v31 = vld [vmem:[%s0 + $0x20] sm:$0xff]
  %v32 = vld [vmem:[%s0 + $0x28] sm:$0xff]
  %v33 = vld [vmem:[%s0 + $0x30] sm:$0xff]
  %v34 = vld [vmem:[%s0 + $0x38] sm:$0xff]
  %v35 = vpack.c.bf16 %v28, %v27
  %v36 = vpack.c.bf16 %v30, %v29
  %v37 = vpack.c.bf16 %v32, %v31
  %v38 = vpack.c.bf16 %v34, %v33
  %v39 = vld [vmem:[%s1] sm:$0xf]
  %v40 = vld [vmem:[%s1 + $0x4] sm:$0xf]
  %v41 = vld [vmem:[%s1 + $0x8] sm:$0xf]
  %v42 = vld [vmem:[%s1 + $0xc] sm:$0xf]
  %v43 = vld [vmem:[%s1 + $0x10] sm:$0xf]
  %v44 = vld [vmem:[%s1 + $0x14] sm:$0xf]
  %v45 = vld [vmem:[%s1 + $0x18] sm:$0xf]
  %v46 = vld [vmem:[%s1 + $0x1c] sm:$0xf]
  %v47 = vld [vmem:[%s1 + $0x20] sm:$0xf]
  %v48 = vld [vmem:[%s1 + $0x24] sm:$0xf]
  %v49 = vld [vmem:[%s1 + $0x28] sm:$0xf]
  %v50 = vld [vmem:[%s1 + $0x2c] sm:$0xf]
  %v51 = vld [vmem:[%s1 + $0x30] sm:$0xf]
  %v52 = vld [vmem:[%s1 + $0x34] sm:$0xf]
  %v53 = vld [vmem:[%s1 + $0x38] sm:$0xf]
  %v54 = vld [vmem:[%s1 + $0x3c] sm:$0xf]
  %v55 = vld [vmem:[%s2] sm:$0x1]
  %v57 = vlaneseq
  %v58 = vshrl.u32 %v57, 7
  %v59 = vsub.s32 0, %v58
  %v60 = vrot.slane %v55, %v59
  %v78 = vunpack.c.l.b16 %v39
  %v79 = vunpack.c.l.b16 %v40
  %v80 = vunpack.c.l.b16 %v41
  %v81 = vunpack.c.l.b16 %v42
  %v82 = vunpack.c.l.b16 %v43
  %v83 = vunpack.c.l.b16 %v44
  %v84 = vunpack.c.l.b16 %v45
  %v85 = vunpack.c.l.b16 %v46
  %v86 = vunpack.c.l.b16 %v47
  %v87 = vunpack.c.l.b16 %v48
  %v88 = vunpack.c.l.b16 %v49
  %v89 = vunpack.c.l.b16 %v50
  %v90 = vunpack.c.l.b16 %v51
  %v91 = vunpack.c.l.b16 %v52
  %v92 = vunpack.c.l.b16 %v53
  %v93 = vunpack.c.l.b16 %v54
  %v94 = vpack.c.b16 %v79, %v78
  %v95 = vpack.c.b16 %v81, %v80
  %v96 = vpack.c.b16 %v83, %v82
  %v97 = vpack.c.b16 %v85, %v84
  %v98 = vpack.c.b16 %v87, %v86
  %v99 = vpack.c.b16 %v89, %v88
  %v100 = vpack.c.b16 %v91, %v90
  %v101 = vpack.c.b16 %v93, %v92
  %110 = vmatprep.subr.bf16.mxu0 0
  %111 = vmatpush1.bf16.msra.mxu0 %v94
  %112 = vmatprep.subr.bf16.mxu0 0
  %113 = vmatpush1.bf16.msra.mxu0 %v95
  %114 = vmatprep.subr.bf16.mxu0 0
  %115 = vmatpush1.bf16.msra.mxu0 %v96
  %116 = vmatprep.subr.bf16.mxu0 0
  %117 = vmatpush1.bf16.msra.mxu0 %v97
  %118 = vmatprep.subr.bf16.mxu0 0
  %119 = vmatpush1.bf16.msra.mxu0 %v98
  %120 = vmatprep.subr.bf16.mxu0 0
  %121 = vmatpush1.bf16.msra.mxu0 %v99
  %122 = vmatprep.subr.bf16.mxu0 0
  %123 = vmatpush1.bf16.msra.mxu0 %v100
  %124 = vmatprep.subr.bf16.mxu0 0
  %125 = vmatpush1.bf16.msra.mxu0 %v101
  %126 = vmatprep.subr.bf16.mxu0 0
  %127 = vmatpush1.bf16.msra.mxu0 0
  %128 = vmatprep.subr.bf16.mxu0 0
  %129 = vmatpush1.bf16.msra.mxu0 0
  %130 = vmatprep.subr.bf16.mxu0 0
  %131 = vmatpush1.bf16.msra.mxu0 0
  %132 = vmatprep.subr.bf16.mxu0 0
  %133 = vmatpush1.bf16.msra.mxu0 0
  %134 = vmatprep.subr.bf16.mxu0 0
  %135 = vmatpush1.bf16.msra.mxu0 0
  %136 = vmatprep.subr.bf16.mxu0 0
  %137 = vmatpush1.bf16.msra.mxu0 0
  %138 = vmatprep.subr.bf16.mxu0 0
  %139 = vmatpush1.bf16.msra.mxu0 0
  %140 = vmatprep.subr.bf16.mxu0 0
  %141 = vmatpush1.bf16.msra.mxu0 0
  %142 = vmatprep.mubr.bf16.mxu0 0
  %143 = vmatmul.mubr.bf16.gmra.mrb[0].mxu0 %v35
  %v144 = vpop.f32.mrb[0].mxu0
  %v145 = vadd.f32 %v60, %v144
  %v146 = vpop.f32.mrb[0].mxu0
  %v147 = vpop.f32.mrb[0].mxu0
  %v148 = vadd.f32 %v60, %v147
  %v149 = vpop.f32.mrb[0].mxu0
  %150 = vmatprep.mubr.bf16.mxu0 0
  %151 = vmatmul.mubr.bf16.gmra.mrb[0].mxu0 %v36
  %v152 = vpop.f32.mrb[0].mxu0
  %v153 = vadd.f32 %v60, %v152
  %v154 = vpop.f32.mrb[0].mxu0
  %v155 = vpop.f32.mrb[0].mxu0
  %v156 = vadd.f32 %v60, %v155
  %v157 = vpop.f32.mrb[0].mxu0
  %158 = vmatprep.mubr.bf16.mxu0 0
  %159 = vmatmul.mubr.bf16.gmra.mrb[0].mxu0 %v37
  %v160 = vpop.f32.mrb[0].mxu0
  %v161 = vadd.f32 %v60, %v160
  %v162 = vpop.f32.mrb[0].mxu0
  %v163 = vpop.f32.mrb[0].mxu0
  %v164 = vadd.f32 %v60, %v163
  %v165 = vpop.f32.mrb[0].mxu0
  %166 = vmatprep.mubr.bf16.mxu0 0
  %167 = vmatmul.mubr.bf16.gmra.mrb[0].mxu0 %v38
  %v168 = vpop.f32.mrb[0].mxu0
  %v169 = vadd.f32 %v60, %v168
  %v170 = vpop.f32.mrb[0].mxu0
  %v171 = vpop.f32.mrb[0].mxu0
  %v172 = vadd.f32 %v60, %v171
  %v173 = vpop.f32.mrb[0].mxu0
  %174 = vdwg.mxu0
  %v175 = vmax.f32 %v145, 0.0
  %v176 = vmax.f32 %v148, 0.0
  %v177 = vmax.f32 %v153, 0.0
  %v178 = vmax.f32 %v156, 0.0
  %v179 = vmax.f32 %v161, 0.0
  %v180 = vmax.f32 %v164, 0.0
  %v181 = vmax.f32 %v169, 0.0
  %v182 = vmax.f32 %v172, 0.0
  %v183 = vpack.c.bf16 %v176, %v175
  %v184 = vpack.c.bf16 %v178, %v177
  %v185 = vpack.c.bf16 %v180, %v179
  %v186 = vpack.c.bf16 %v182, %v181
  %v187 = vld [vmem:[%s3] sm:$0xf]
  %v188 = vld [vmem:[%s3 + $0x4] sm:$0xf]
  %v189 = vld [vmem:[%s3 + $0x8] sm:$0xf]
  %v190 = vld [vmem:[%s3 + $0xc] sm:$0xf]
  %v191 = vld [vmem:[%s3 + $0x10] sm:$0xf]
  %v192 = vld [vmem:[%s3 + $0x14] sm:$0xf]
  %v193 = vld [vmem:[%s3 + $0x18] sm:$0xf]
  %v194 = vld [vmem:[%s3 + $0x1c] sm:$0xf]
  %v195 = vld [vmem:[%s3 + $0x20] sm:$0xf]
  %v196 = vld [vmem:[%s3 + $0x24] sm:$0xf]
  %v197 = vld [vmem:[%s3 + $0x28] sm:$0xf]
  %v198 = vld [vmem:[%s3 + $0x2c] sm:$0xf]
  %v199 = vld [vmem:[%s3 + $0x30] sm:$0xf]
  %v200 = vld [vmem:[%s3 + $0x34] sm:$0xf]
  %v201 = vld [vmem:[%s3 + $0x38] sm:$0xf]
  %v202 = vld [vmem:[%s3 + $0x3c] sm:$0xf]
  %v203 = vld [vmem:[%s4] sm:$0x1]
  %v205 = vlaneseq
  %v206 = vshrl.u32 %v205, 7
  %v207 = vsub.s32 0, %v206
  %v208 = vrot.slane %v203, %v207
  %v226 = vunpack.c.l.b16 %v187
  %v227 = vunpack.c.l.b16 %v188
  %v228 = vunpack.c.l.b16 %v189
  %v229 = vunpack.c.l.b16 %v190
  %v230 = vunpack.c.l.b16 %v191
  %v231 = vunpack.c.l.b16 %v192
  %v232 = vunpack.c.l.b16 %v193
  %v233 = vunpack.c.l.b16 %v194
  %v234 = vunpack.c.l.b16 %v195
  %v235 = vunpack.c.l.b16 %v196
  %v236 = vunpack.c.l.b16 %v197
  %v237 = vunpack.c.l.b16 %v198
  %v238 = vunpack.c.l.b16 %v199
  %v239 = vunpack.c.l.b16 %v200
  %v240 = vunpack.c.l.b16 %v201
  %v241 = vunpack.c.l.b16 %v202
  %v242 = vpack.c.b16 %v227, %v226
  %v243 = vpack.c.b16 %v229, %v228
  %v244 = vpack.c.b16 %v231, %v230
  %v245 = vpack.c.b16 %v233, %v232
  %v246 = vpack.c.b16 %v235, %v234
  %v247 = vpack.c.b16 %v237, %v236
  %v248 = vpack.c.b16 %v239, %v238
  %v249 = vpack.c.b16 %v241, %v240
  %258 = vmatprep.subr.bf16.mxu0 0
  %259 = vmatpush1.bf16.msra.mxu0 %v242
  %260 = vmatprep.subr.bf16.mxu0 0
  %261 = vmatpush1.bf16.msra.mxu0 %v243
  %262 = vmatprep.subr.bf16.mxu0 0
  %263 = vmatpush1.bf16.msra.mxu0 %v244
  %264 = vmatprep.subr.bf16.mxu0 0
  %265 = vmatpush1.bf16.msra.mxu0 %v245
  %266 = vmatprep.subr.bf16.mxu0 0
  %267 = vmatpush1.bf16.msra.mxu0 %v246
  %268 = vmatprep.subr.bf16.mxu0 0
  %269 = vmatpush1.bf16.msra.mxu0 %v247
  %270 = vmatprep.subr.bf16.mxu0 0
  %271 = vmatpush1.bf16.msra.mxu0 %v248
  %272 = vmatprep.subr.bf16.mxu0 0
  %273 = vmatpush1.bf16.msra.mxu0 %v249
  %274 = vmatprep.subr.bf16.mxu0 0
  %275 = vmatpush1.bf16.msra.mxu0 0
  %276 = vmatprep.subr.bf16.mxu0 0
  %277 = vmatpush1.bf16.msra.mxu0 0
  %278 = vmatprep.subr.bf16.mxu0 0
  %279 = vmatpush1.bf16.msra.mxu0 0
  %280 = vmatprep.subr.bf16.mxu0 0
  %281 = vmatpush1.bf16.msra.mxu0 0
  %282 = vmatprep.subr.bf16.mxu0 0
  %283 = vmatpush1.bf16.msra.mxu0 0
  %284 = vmatprep.subr.bf16.mxu0 0
  %285 = vmatpush1.bf16.msra.mxu0 0
  %286 = vmatprep.subr.bf16.mxu0 0
  %287 = vmatpush1.bf16.msra.mxu0 0
  %288 = vmatprep.subr.bf16.mxu0 0
  %289 = vmatpush1.bf16.msra.mxu0 0
  %290 = vmatprep.mubr.bf16.mxu0 0
  %291 = vmatmul.mubr.bf16.gmra.mrb[0].mxu0 %v183
  %v292 = vpop.f32.mrb[0].mxu0
  %v293 = vadd.f32 %v208, %v292
  %v294 = vpop.f32.mrb[0].mxu0
  %v295 = vpop.f32.mrb[0].mxu0
  %v296 = vadd.f32 %v208, %v295
  %v297 = vpop.f32.mrb[0].mxu0
  %298 = vmatprep.mubr.bf16.mxu0 0
  %299 = vmatmul.mubr.bf16.gmra.mrb[0].mxu0 %v184
  %v300 = vpop.f32.mrb[0].mxu0
  %v301 = vadd.f32 %v208, %v300
  %v302 = vpop.f32.mrb[0].mxu0
  %v303 = vpop.f32.mrb[0].mxu0
  %v304 = vadd.f32 %v208, %v303
  %v305 = vpop.f32.mrb[0].mxu0
  %306 = vmatprep.mubr.bf16.mxu0 0
  %307 = vmatmul.mubr.bf16.gmra.mrb[0].mxu0 %v185
  %v308 = vpop.f32.mrb[0].mxu0
  %v309 = vadd.f32 %v208, %v308
  %v310 = vpop.f32.mrb[0].mxu0
  %v311 = vpop.f32.mrb[0].mxu0
  %v312 = vadd.f32 %v208, %v311
  %v313 = vpop.f32.mrb[0].mxu0
  %314 = vmatprep.mubr.bf16.mxu0 0
  %315 = vmatmul.mubr.bf16.gmra.mrb[0].mxu0 %v186
  %v316 = vpop.f32.mrb[0].mxu0
  %v317 = vadd.f32 %v208, %v316
  %v318 = vpop.f32.mrb[0].mxu0
  %v319 = vpop.f32.mrb[0].mxu0
  %v320 = vadd.f32 %v208, %v319
  %v321 = vpop.f32.mrb[0].mxu0
  %322 = vdwg.mxu0
  %v323 = vmax.f32 %v293, 0.0
  %v324 = vmax.f32 %v296, 0.0
  %v325 = vmax.f32 %v301, 0.0
  %v326 = vmax.f32 %v304, 0.0
  %v327 = vmax.f32 %v309, 0.0
  %v328 = vmax.f32 %v312, 0.0
  %v329 = vmax.f32 %v317, 0.0
  %v330 = vmax.f32 %v320, 0.0
  %v331 = vpack.c.bf16 %v324, %v323
  %v332 = vpack.c.bf16 %v326, %v325
  %v333 = vpack.c.bf16 %v328, %v327
  %v334 = vpack.c.bf16 %v330, %v329
  %v335 = vld [vmem:[%s5] sm:$0xf]
  %v336 = vld [vmem:[%s5 + $0x4] sm:$0xf]
  %v337 = vld [vmem:[%s5 + $0x8] sm:$0xf]
  %v338 = vld [vmem:[%s5 + $0xc] sm:$0xf]
  %v339 = vld [vmem:[%s5 + $0x10] sm:$0xf]
  %v340 = vld [vmem:[%s5 + $0x14] sm:$0xf]
  %v341 = vld [vmem:[%s5 + $0x18] sm:$0xf]
  %v342 = vld [vmem:[%s5 + $0x1c] sm:$0xf]
  %v343 = vld [vmem:[%s5 + $0x20] sm:$0xf]
  %v344 = vld [vmem:[%s5 + $0x24] sm:$0xf]
  %v345 = vld [vmem:[%s5 + $0x28] sm:$0xf]
  %v346 = vld [vmem:[%s5 + $0x2c] sm:$0xf]
  %v347 = vld [vmem:[%s5 + $0x30] sm:$0xf]
  %v348 = vld [vmem:[%s5 + $0x34] sm:$0xf]
  %v349 = vld [vmem:[%s5 + $0x38] sm:$0xf]
  %v350 = vld [vmem:[%s5 + $0x3c] sm:$0xf]
  %v351 = vld [vmem:[%s6] sm:$0x1]
  %v353 = vlaneseq
  %v354 = vshrl.u32 %v353, 7
  %v355 = vsub.s32 0, %v354
  %v356 = vrot.slane %v351, %v355
  %v374 = vunpack.c.l.b16 %v335
  %v375 = vunpack.c.l.b16 %v336
  %v376 = vunpack.c.l.b16 %v337
  %v377 = vunpack.c.l.b16 %v338
  %v378 = vunpack.c.l.b16 %v339
  %v379 = vunpack.c.l.b16 %v340
  %v380 = vunpack.c.l.b16 %v341
  %v381 = vunpack.c.l.b16 %v342
  %v382 = vunpack.c.l.b16 %v343
  %v383 = vunpack.c.l.b16 %v344
  %v384 = vunpack.c.l.b16 %v345
  %v385 = vunpack.c.l.b16 %v346
  %v386 = vunpack.c.l.b16 %v347
  %v387 = vunpack.c.l.b16 %v348
  %v388 = vunpack.c.l.b16 %v349
  %v389 = vunpack.c.l.b16 %v350
  %v390 = vpack.c.b16 %v375, %v374
  %v391 = vpack.c.b16 %v377, %v376
  %v392 = vpack.c.b16 %v379, %v378
  %v393 = vpack.c.b16 %v381, %v380
  %v394 = vpack.c.b16 %v383, %v382
  %v395 = vpack.c.b16 %v385, %v384
  %v396 = vpack.c.b16 %v387, %v386
  %v397 = vpack.c.b16 %v389, %v388
  %406 = vmatprep.subr.bf16.mxu0 0
  %407 = vmatpush1.bf16.msra.mxu0 %v390
  %408 = vmatprep.subr.bf16.mxu0 0
  %409 = vmatpush1.bf16.msra.mxu0 %v391
  %410 = vmatprep.subr.bf16.mxu0 0
  %411 = vmatpush1.bf16.msra.mxu0 %v392
  %412 = vmatprep.subr.bf16.mxu0 0
  %413 = vmatpush1.bf16.msra.mxu0 %v393
  %414 = vmatprep.subr.bf16.mxu0 0
  %415 = vmatpush1.bf16.msra.mxu0 %v394
  %416 = vmatprep.subr.bf16.mxu0 0
  %417 = vmatpush1.bf16.msra.mxu0 %v395
  %418 = vmatprep.subr.bf16.mxu0 0
  %419 = vmatpush1.bf16.msra.mxu0 %v396
  %420 = vmatprep.subr.bf16.mxu0 0
  %421 = vmatpush1.bf16.msra.mxu0 %v397
  %422 = vmatprep.subr.bf16.mxu0 0
  %423 = vmatpush1.bf16.msra.mxu0 0
  %424 = vmatprep.subr.bf16.mxu0 0
  %425 = vmatpush1.bf16.msra.mxu0 0
  %426 = vmatprep.subr.bf16.mxu0 0
  %427 = vmatpush1.bf16.msra.mxu0 0
  %428 = vmatprep.subr.bf16.mxu0 0
  %429 = vmatpush1.bf16.msra.mxu0 0
  %430 = vmatprep.subr.bf16.mxu0 0
  %431 = vmatpush1.bf16.msra.mxu0 0
  %432 = vmatprep.subr.bf16.mxu0 0
  %433 = vmatpush1.bf16.msra.mxu0 0
  %434 = vmatprep.subr.bf16.mxu0 0
  %435 = vmatpush1.bf16.msra.mxu0 0
  %436 = vmatprep.subr.bf16.mxu0 0
  %437 = vmatpush1.bf16.msra.mxu0 0
  %438 = vmatprep.mubr.bf16.mxu0 0
  %439 = vmatmul.mubr.bf16.gmra.mrb[0].mxu0 %v331
  %v440 = vpop.f32.mrb[0].mxu0
  %v441 = vadd.f32 %v356, %v440
  %v442 = vpop.f32.mrb[0].mxu0
  %v443 = vpop.f32.mrb[0].mxu0
  %v444 = vadd.f32 %v356, %v443
  %v445 = vpop.f32.mrb[0].mxu0
  %446 = vmatprep.mubr.bf16.mxu0 0
  %447 = vmatmul.mubr.bf16.gmra.mrb[0].mxu0 %v332
  %v448 = vpop.f32.mrb[0].mxu0
  %v449 = vadd.f32 %v356, %v448
  %v450 = vpop.f32.mrb[0].mxu0
  %v451 = vpop.f32.mrb[0].mxu0
  %v452 = vadd.f32 %v356, %v451
  %v453 = vpop.f32.mrb[0].mxu0
  %454 = vmatprep.mubr.bf16.mxu0 0
  %455 = vmatmul.mubr.bf16.gmra.mrb[0].mxu0 %v333
  %v456 = vpop.f32.mrb[0].mxu0
  %v457 = vadd.f32 %v356, %v456
  %v458 = vpop.f32.mrb[0].mxu0
  %v459 = vpop.f32.mrb[0].mxu0
  %v460 = vadd.f32 %v356, %v459
  %v461 = vpop.f32.mrb[0].mxu0
  %462 = vmatprep.mubr.bf16.mxu0 0
  %463 = vmatmul.mubr.bf16.gmra.mrb[0].mxu0 %v334
  %v464 = vpop.f32.mrb[0].mxu0
  %v465 = vadd.f32 %v356, %v464
  %v466 = vpop.f32.mrb[0].mxu0
  %v467 = vpop.f32.mrb[0].mxu0
  %v468 = vadd.f32 %v356, %v467
  %v469 = vpop.f32.mrb[0].mxu0
  %470 = vdwg.mxu0
  %v471 = vmax.f32 %v441, 0.0
  %v472 = vmax.f32 %v444, 0.0
  %v473 = vmax.f32 %v449, 0.0
  %v474 = vmax.f32 %v452, 0.0
  %v475 = vmax.f32 %v457, 0.0
  %v476 = vmax.f32 %v460, 0.0
  %v477 = vmax.f32 %v465, 0.0
  %v478 = vmax.f32 %v468, 0.0
  %479 = vst [vmem:[%s7] sm:$0xff] %v471
  %480 = vst [vmem:[%s7 + $0x8] sm:$0xff] %v472
  %481 = vst [vmem:[%s7 + $0x10] sm:$0xff] %v473
  %482 = vst [vmem:[%s7 + $0x18] sm:$0xff] %v474
  %483 = vst [vmem:[%s7 + $0x20] sm:$0xff] %v475
  %484 = vst [vmem:[%s7 + $0x28] sm:$0xff] %v476
  %485 = vst [vmem:[%s7 + $0x30] sm:$0xff] %v477
  %486 = vst [vmem:[%s7 + $0x38] sm:$0xff] %v478
  // Predicated region
  $region30: #{encoder_forward.1} parent=0 // pred_check
    _
  $region31: #{encoder_forward.1} parent=0 // pred_check_branch
    %488 = sbr.rel (0) target = $region33
  $region32: #{encoder_forward.1} parent=0 // pred_region
    _
  $region33: #{encoder_forward.1} parent=0 // pred_fallthru
    _
  // Predicated region
  $region34: #{encoder_forward.1} parent=0 // pred_check
    _
  $region35: #{encoder_forward.1} parent=0 // pred_check_branch
    %490 = sbr.rel (0) target = $region37
  $region36: #{encoder_forward.1} parent=0 // pred_region
    _
  $region37: #{encoder_forward.1} parent=0 // pred_fallthru
    _

// kernel: encoder_forward.1
$region0: #{encoder_forward.1}
  #allocation0 [shape = 'u32[]', space=smem, size = 0x4, offset = 0x4, fixed_abs, tag = 'smem constant byte address 0x4 - core index']
  #allocation1 [shape = 'u32[144,128]{1,0:T(1,128)}', space=vmem, size = 0x12000, scoped, tag = 'internal scratch']
  %s0 = inlined_call_operand.vmem [shape: f32[64,128], index: 0, kind: input, shape index: {}]
  %s1 = inlined_call_operand.vmem [shape: bf16[128,128], index: 1, kind: input, shape index: {}]
  %s2 = inlined_call_operand.vmem [shape: f32[1,128], index: 2, kind: input, shape index: {}]
  %s3 = inlined_call_operand.vmem [shape: bf16[128,128], index: 3, kind: input, shape index: {}]
  %s4 = inlined_call_operand.vmem [shape: f32[1,128], index: 4, kind: input, shape index: {}]
  %s5 = inlined_call_operand.vmem [shape: bf16[128,128], index: 5, kind: input, shape index: {}]
  %s6 = inlined_call_operand.vmem [shape: f32[1,128], index: 6, kind: input, shape index: {}]
  %s7 = inlined_call_operand.vmem [shape: f32[64,128], index: 7, kind: output, shape index: {}]
  %s8 = sld [smem:[#allocation0]]
  $region38: #{encoder_forward.1} parent=0
    _
  %s10 = ssub.s32 1, %s8
  %s11 = scalar_select 0, %s10, %s8
  // Predicated region
  $region2: #{encoder_forward.1} parent=0 // pred_check
    _
  $region3: #{encoder_forward.1} parent=0 // pred_check_branch
    %13 = sbr.rel (0) target = $region5
  $region4: #{encoder_forward.1} parent=0 // pred_region
    _
  $region5: #{encoder_forward.1} parent=0 // pred_fallthru
    _
  // Predicated region
  $region6: #{encoder_forward.1} parent=0 // pred_check
    _
  $region7: #{encoder_forward.1} parent=0 // pred_check_branch
    %15 = sbr.rel (0) target = $region9
  $region8: #{encoder_forward.1} parent=0 // pred_region
    _
  $region9: #{encoder_forward.1} parent=0 // pred_fallthru
    _
  // Predicated region
  $region10: #{encoder_forward.1} parent=0 // pred_check
    _
  $region11: #{encoder_forward.1} parent=0 // pred_check_branch
    %17 = sbr.rel (0) target = $region13
  $region12: #{encoder_forward.1} parent=0 // pred_region
    _
  $region13: #{encoder_forward.1} parent=0 // pred_fallthru
    _
  // Predicated region
  $region14: #{encoder_forward.1} parent=0 // pred_check
    _
  $region15: #{encoder_forward.1} parent=0 // pred_check_branch
    %19 = sbr.rel (0) target = $region17
  $region16: #{encoder_forward.1} parent=0 // pred_region
    _
  $region17: #{encoder_forward.1} parent=0 // pred_fallthru
    _
  // Predicated region
  $region18: #{encoder_forward.1} parent=0 // pred_check
    _
  $region19: #{encoder_forward.1} parent=0 // pred_check_branch
    %21 = sbr.rel (0) target = $region21
  $region20: #{encoder_forward.1} parent=0 // pred_region
    _
  $region21: #{encoder_forward.1} parent=0 // pred_fallthru
    _
  // Predicated region
  $region22: #{encoder_forward.1} parent=0 // pred_check
    _
  $region23: #{encoder_forward.1} parent=0 // pred_check_branch
    %23 = sbr.rel (0) target = $region25
  $region24: #{encoder_forward.1} parent=0 // pred_region
    _
  $region25: #{encoder_forward.1} parent=0 // pred_fallthru
    _
  // Predicated region
  $region26: #{encoder_forward.1} parent=0 // pred_check
    _
  $region27: #{encoder_forward.1} parent=0 // pred_check_branch
    %25 = sbr.rel (0) target = $region29
  $region28: #{encoder_forward.1} parent=0 // pred_region
    _
  $region29: #{encoder_forward.1} parent=0 // pred_fallthru
    _
  %v27 = vld [vmem:[%s0] sm:$0xff]
  %v28 = vld [vmem:[%s0 + $0x8] sm:$0xff]
  %v29 = vld [vmem:[%s0 + $0x10] sm:$0xff]
  %v30 = vld [vmem:[%s0 + $0x18] sm:$0xff]
  %v31 = vld [vmem:[%s0 + $0x20] sm:$0xff]
  %v32 = vld [vmem:[%s0 + $0x28] sm:$0xff]
  %v33 = vld [vmem:[%s0 + $0x30] sm:$0xff]
  %v34 = vld [vmem:[%s0 + $0x38] sm:$0xff]
  %v35 = vpack.c.bf16 %v28, %v27
  %v36 = vpack.c.bf16 %v30, %v29
  %v37 = vpack.c.bf16 %v32, %v31
  %v38 = vpack.c.bf16 %v34, %v33
  %v39 = vld [vmem:[%s1] sm:$0xf]
  %v40 = vld [vmem:[%s1 + $0x4] sm:$0xf]
  %v41 = vld [vmem:[%s1 + $0x8] sm:$0xf]
  %v42 = vld [vmem:[%s1 + $0xc] sm:$0xf]
  %v43 = vld [vmem:[%s1 + $0x10] sm:$0xf]
  %v44 = vld [vmem:[%s1 + $0x14] sm:$0xf]
  %v45 = vld [vmem:[%s1 + $0x18] sm:$0xf]
  %v46 = vld [vmem:[%s1 + $0x1c] sm:$0xf]
  %v47 = vld [vmem:[%s1 + $0x20] sm:$0xf]
  %v48 = vld [vmem:[%s1 + $0x24] sm:$0xf]
  %v49 = vld [vmem:[%s1 + $0x28] sm:$0xf]
  %v50 = vld [vmem:[%s1 + $0x2c] sm:$0xf]
  %v51 = vld [vmem:[%s1 + $0x30] sm:$0xf]
  %v52 = vld [vmem:[%s1 + $0x34] sm:$0xf]
  %v53 = vld [vmem:[%s1 + $0x38] sm:$0xf]
  %v54 = vld [vmem:[%s1 + $0x3c] sm:$0xf]
  %v55 = vld [vmem:[%s2] sm:$0x1]
  %v57 = vlaneseq
  %v58 = vshrl.u32 %v57, 7
  %v59 = vsub.s32 0, %v58
  %v60 = vrot.slane %v55, %v59
  %v78 = vunpack.c.l.b16 %v39
  %v79 = vunpack.c.l.b16 %v40
  %v80 = vunpack.c.l.b16 %v41
  %v81 = vunpack.c.l.b16 %v42
  %v82 = vunpack.c.l.b16 %v43
  %v83 = vunpack.c.l.b16 %v44
  %v84 = vunpack.c.l.b16 %v45
  %v85 = vunpack.c.l.b16 %v46
  %v86 = vunpack.c.l.b16 %v47
  %v87 = vunpack.c.l.b16 %v48
  %v88 = vunpack.c.l.b16 %v49
  %v89 = vunpack.c.l.b16 %v50
  %v90 = vunpack.c.l.b16 %v51
  %v91 = vunpack.c.l.b16 %v52
  %v92 = vunpack.c.l.b16 %v53
  %v93 = vunpack.c.l.b16 %v54
  %v94 = vpack.c.b16 %v79, %v78
  %v95 = vpack.c.b16 %v81, %v80
  %v96 = vpack.c.b16 %v83, %v82
  %v97 = vpack.c.b16 %v85, %v84
  %v98 = vpack.c.b16 %v87, %v86
  %v99 = vpack.c.b16 %v89, %v88
  %v100 = vpack.c.b16 %v91, %v90
  %v101 = vpack.c.b16 %v93, %v92
  %110 = vmatprep.subr.bf16.mxu0 0
  %111 = vmatpush1.bf16.msra.mxu0 %v94
  %112 = vmatprep.subr.bf16.mxu0 0
  %113 = vmatpush1.bf16.msra.mxu0 %v95
  %114 = vmatprep.subr.bf16.mxu0 0
  %115 = vmatpush1.bf16.msra.mxu0 %v96
  %116 = vmatprep.subr.bf16.mxu0 0
  %117 = vmatpush1.bf16.msra.mxu0 %v97
  %118 = vmatprep.subr.bf16.mxu0 0
  %119 = vmatpush1.bf16.msra.mxu0 %v98
  %120 = vmatprep.subr.bf16.mxu0 0
  %121 = vmatpush1.bf16.msra.mxu0 %v99
  %122 = vmatprep.subr.bf16.mxu0 0
  %123 = vmatpush1.bf16.msra.mxu0 %v100
  %124 = vmatprep.subr.bf16.mxu0 0
  %125 = vmatpush1.bf16.msra.mxu0 %v101
  %126 = vmatprep.subr.bf16.mxu0 0
  %127 = vmatpush1.bf16.msra.mxu0 0
  %128 = vmatprep.subr.bf16.mxu0 0
  %129 = vmatpush1.bf16.msra.mxu0 0
  %130 = vmatprep.subr.bf16.mxu0 0
  %131 = vmatpush1.bf16.msra.mxu0 0
  %132 = vmatprep.subr.bf16.mxu0 0
  %133 = vmatpush1.bf16.msra.mxu0 0
  %134 = vmatprep.subr.bf16.mxu0 0
  %135 = vmatpush1.bf16.msra.mxu0 0
  %136 = vmatprep.subr.bf16.mxu0 0
  %137 = vmatpush1.bf16.msra.mxu0 0
  %138 = vmatprep.subr.bf16.mxu0 0
  %139 = vmatpush1.bf16.msra.mxu0 0
  %140 = vmatprep.subr.bf16.mxu0 0
  %141 = vmatpush1.bf16.msra.mxu0 0
  %142 = vmatprep.mubr.bf16.mxu0 0
  %143 = vmatmul.mubr.bf16.gmra.mrb[0].mxu0 %v35
  %v144 = vpop.f32.mrb[0].mxu0
  %v145 = vadd.f32 %v60, %v144
  %v146 = vpop.f32.mrb[0].mxu0
  %v147 = vpop.f32.mrb[0].mxu0
  %v148 = vadd.f32 %v60, %v147
  %v149 = vpop.f32.mrb[0].mxu0
  %150 = vmatprep.mubr.bf16.mxu0 0
  %151 = vmatmul.mubr.bf16.gmra.mrb[0].mxu0 %v36
  %v152 = vpop.f32.mrb[0].mxu0
  %v153 = vadd.f32 %v60, %v152
  %v154 = vpop.f32.mrb[0].mxu0
  %v155 = vpop.f32.mrb[0].mxu0
  %v156 = vadd.f32 %v60, %v155
  %v157 = vpop.f32.mrb[0].mxu0
  %158 = vmatprep.mubr.bf16.mxu0 0
  %159 = vmatmul.mubr.bf16.gmra.mrb[0].mxu0 %v37
  %v160 = vpop.f32.mrb[0].mxu0
  %v161 = vadd.f32 %v60, %v160
  %v162 = vpop.f32.mrb[0].mxu0
  %v163 = vpop.f32.mrb[0].mxu0
  %v164 = vadd.f32 %v60, %v163
  %v165 = vpop.f32.mrb[0].mxu0
  %166 = vmatprep.mubr.bf16.mxu0 0
  %167 = vmatmul.mubr.bf16.gmra.mrb[0].mxu0 %v38
  %v168 = vpop.f32.mrb[0].mxu0
  %v169 = vadd.f32 %v60, %v168
  %v170 = vpop.f32.mrb[0].mxu0
  %v171 = vpop.f32.mrb[0].mxu0
  %v172 = vadd.f32 %v60, %v171
  %v173 = vpop.f32.mrb[0].mxu0
  %174 = vdwg.mxu0
  %v175 = vmax.f32 %v145, 0.0
  %v176 = vmax.f32 %v148, 0.0
  %v177 = vmax.f32 %v153, 0.0
  %v178 = vmax.f32 %v156, 0.0
  %v179 = vmax.f32 %v161, 0.0
  %v180 = vmax.f32 %v164, 0.0
  %v181 = vmax.f32 %v169, 0.0
  %v182 = vmax.f32 %v172, 0.0
  %v183 = vpack.c.bf16 %v176, %v175
  %v184 = vpack.c.bf16 %v178, %v177
  %v185 = vpack.c.bf16 %v180, %v179
  %v186 = vpack.c.bf16 %v182, %v181
  %v187 = vld [vmem:[%s3] sm:$0xf]
  %v188 = vld [vmem:[%s3 + $0x4] sm:$0xf]
  %v189 = vld [vmem:[%s3 + $0x8] sm:$0xf]
  %v190 = vld [vmem:[%s3 + $0xc] sm:$0xf]
  %v191 = vld [vmem:[%s3 + $0x10] sm:$0xf]
  %v192 = vld [vmem:[%s3 + $0x14] sm:$0xf]
  %v193 = vld [vmem:[%s3 + $0x18] sm:$0xf]
  %v194 = vld [vmem:[%s3 + $0x1c] sm:$0xf]
  %v195 = vld [vmem:[%s3 + $0x20] sm:$0xf]
  %v196 = vld [vmem:[%s3 + $0x24] sm:$0xf]
  %v197 = vld [vmem:[%s3 + $0x28] sm:$0xf]
  %v198 = vld [vmem:[%s3 + $0x2c] sm:$0xf]
  %v199 = vld [vmem:[%s3 + $0x30] sm:$0xf]
  %v200 = vld [vmem:[%s3 + $0x34] sm:$0xf]
  %v201 = vld [vmem:[%s3 + $0x38] sm:$0xf]
  %v202 = vld [vmem:[%s3 + $0x3c] sm:$0xf]
  %v203 = vld [vmem:[%s4] sm:$0x1]
  %v205 = vlaneseq
  %v206 = vshrl.u32 %v205, 7
  %v207 = vsub.s32 0, %v206
  %v208 = vrot.slane %v203, %v207
  %v226 = vunpack.c.l.b16 %v187
  %v227 = vunpack.c.l.b16 %v188
  %v228 = vunpack.c.l.b16 %v189
  %v229 = vunpack.c.l.b16 %v190
  %v230 = vunpack.c.l.b16 %v191
  %v231 = vunpack.c.l.b16 %v192
  %v232 = vunpack.c.l.b16 %v193
  %v233 = vunpack.c.l.b16 %v194
  %v234 = vunpack.c.l.b16 %v195
  %v235 = vunpack.c.l.b16 %v196
  %v236 = vunpack.c.l.b16 %v197
  %v237 = vunpack.c.l.b16 %v198
  %v238 = vunpack.c.l.b16 %v199
  %v239 = vunpack.c.l.b16 %v200
  %v240 = vunpack.c.l.b16 %v201
  %v241 = vunpack.c.l.b16 %v202
  %v242 = vpack.c.b16 %v227, %v226
  %v243 = vpack.c.b16 %v229, %v228
  %v244 = vpack.c.b16 %v231, %v230
  %v245 = vpack.c.b16 %v233, %v232
  %v246 = vpack.c.b16 %v235, %v234
  %v247 = vpack.c.b16 %v237, %v236
  %v248 = vpack.c.b16 %v239, %v238
  %v249 = vpack.c.b16 %v241, %v240
  %258 = vmatprep.subr.bf16.mxu0 0
  %259 = vmatpush1.bf16.msra.mxu0 %v242
  %260 = vmatprep.subr.bf16.mxu0 0
  %261 = vmatpush1.bf16.msra.mxu0 %v243
  %262 = vmatprep.subr.bf16.mxu0 0
  %263 = vmatpush1.bf16.msra.mxu0 %v244
  %264 = vmatprep.subr.bf16.mxu0 0
  %265 = vmatpush1.bf16.msra.mxu0 %v245
  %266 = vmatprep.subr.bf16.mxu0 0
  %267 = vmatpush1.bf16.msra.mxu0 %v246
  %268 = vmatprep.subr.bf16.mxu0 0
  %269 = vmatpush1.bf16.msra.mxu0 %v247
  %270 = vmatprep.subr.bf16.mxu0 0
  %271 = vmatpush1.bf16.msra.mxu0 %v248
  %272 = vmatprep.subr.bf16.mxu0 0
  %273 = vmatpush1.bf16.msra.mxu0 %v249
  %274 = vmatprep.subr.bf16.mxu0 0
  %275 = vmatpush1.bf16.msra.mxu0 0
  %276 = vmatprep.subr.bf16.mxu0 0
  %277 = vmatpush1.bf16.msra.mxu0 0
  %278 = vmatprep.subr.bf16.mxu0 0
  %279 = vmatpush1.bf16.msra.mxu0 0
  %280 = vmatprep.subr.bf16.mxu0 0
  %281 = vmatpush1.bf16.msra.mxu0 0
  %282 = vmatprep.subr.bf16.mxu0 0
  %283 = vmatpush1.bf16.msra.mxu0 0
  %284 = vmatprep.subr.bf16.mxu0 0
  %285 = vmatpush1.bf16.msra.mxu0 0
  %286 = vmatprep.subr.bf16.mxu0 0
  %287 = vmatpush1.bf16.msra.mxu0 0
  %288 = vmatprep.subr.bf16.mxu0 0
  %289 = vmatpush1.bf16.msra.mxu0 0
  %290 = vmatprep.mubr.bf16.mxu0 0
  %291 = vmatmul.mubr.bf16.gmra.mrb[0].mxu0 %v183
  %v292 = vpop.f32.mrb[0].mxu0
  %v293 = vadd.f32 %v208, %v292
  %v294 = vpop.f32.mrb[0].mxu0
  %v295 = vpop.f32.mrb[0].mxu0
  %v296 = vadd.f32 %v208, %v295
  %v297 = vpop.f32.mrb[0].mxu0
  %298 = vmatprep.mubr.bf16.mxu0 0
  %299 = vmatmul.mubr.bf16.gmra.mrb[0].mxu0 %v184
  %v300 = vpop.f32.mrb[0].mxu0
  %v301 = vadd.f32 %v208, %v300
  %v302 = vpop.f32.mrb[0].mxu0
  %v303 = vpop.f32.mrb[0].mxu0
  %v304 = vadd.f32 %v208, %v303
  %v305 = vpop.f32.mrb[0].mxu0
  %306 = vmatprep.mubr.bf16.mxu0 0
  %307 = vmatmul.mubr.bf16.gmra.mrb[0].mxu0 %v185
  %v308 = vpop.f32.mrb[0].mxu0
  %v309 = vadd.f32 %v208, %v308
  %v310 = vpop.f32.mrb[0].mxu0
  %v311 = vpop.f32.mrb[0].mxu0
  %v312 = vadd.f32 %v208, %v311
  %v313 = vpop.f32.mrb[0].mxu0
  %314 = vmatprep.mubr.bf16.mxu0 0
  %315 = vmatmul.mubr.bf16.gmra.mrb[0].mxu0 %v186
  %v316 = vpop.f32.mrb[0].mxu0
  %v317 = vadd.f32 %v208, %v316
  %v318 = vpop.f32.mrb[0].mxu0
  %v319 = vpop.f32.mrb[0].mxu0
  %v320 = vadd.f32 %v208, %v319
  %v321 = vpop.f32.mrb[0].mxu0
  %322 = vdwg.mxu0
  %v323 = vmax.f32 %v293, 0.0
  %v324 = vmax.f32 %v296, 0.0
  %v325 = vmax.f32 %v301, 0.0
  %v326 = vmax.f32 %v304, 0.0
  %v327 = vmax.f32 %v309, 0.0
  %v328 = vmax.f32 %v312, 0.0
  %v329 = vmax.f32 %v317, 0.0
  %v330 = vmax.f32 %v320, 0.0
  %v331 = vpack.c.bf16 %v324, %v323
  %v332 = vpack.c.bf16 %v326, %v325
  %v333 = vpack.c.bf16 %v328, %v327
  %v334 = vpack.c.bf16 %v330, %v329
  %v335 = vld [vmem:[%s5] sm:$0xf]
  %v336 = vld [vmem:[%s5 + $0x4] sm:$0xf]
  %v337 = vld [vmem:[%s5 + $0x8] sm:$0xf]
  %v338 = vld [vmem:[%s5 + $0xc] sm:$0xf]
  %v339 = vld [vmem:[%s5 + $0x10] sm:$0xf]
  %v340 = vld [vmem:[%s5 + $0x14] sm:$0xf]
  %v341 = vld [vmem:[%s5 + $0x18] sm:$0xf]
  %v342 = vld [vmem:[%s5 + $0x1c] sm:$0xf]
  %v343 = vld [vmem:[%s5 + $0x20] sm:$0xf]
  %v344 = vld [vmem:[%s5 + $0x24] sm:$0xf]
  %v345 = vld [vmem:[%s5 + $0x28] sm:$0xf]
  %v346 = vld [vmem:[%s5 + $0x2c] sm:$0xf]
  %v347 = vld [vmem:[%s5 + $0x30] sm:$0xf]
  %v348 = vld [vmem:[%s5 + $0x34] sm:$0xf]
  %v349 = vld [vmem:[%s5 + $0x38] sm:$0xf]
  %v350 = vld [vmem:[%s5 + $0x3c] sm:$0xf]
  %v351 = vld [vmem:[%s6] sm:$0x1]
  %v353 = vlaneseq
  %v354 = vshrl.u32 %v353, 7
  %v355 = vsub.s32 0, %v354
  %v356 = vrot.slane %v351, %v355
  %v374 = vunpack.c.l.b16 %v335
  %v375 = vunpack.c.l.b16 %v336
  %v376 = vunpack.c.l.b16 %v337
  %v377 = vunpack.c.l.b16 %v338
  %v378 = vunpack.c.l.b16 %v339
  %v379 = vunpack.c.l.b16 %v340
  %v380 = vunpack.c.l.b16 %v341
  %v381 = vunpack.c.l.b16 %v342
  %v382 = vunpack.c.l.b16 %v343
  %v383 = vunpack.c.l.b16 %v344
  %v384 = vunpack.c.l.b16 %v345
  %v385 = vunpack.c.l.b16 %v346
  %v386 = vunpack.c.l.b16 %v347
  %v387 = vunpack.c.l.b16 %v348
  %v388 = vunpack.c.l.b16 %v349
  %v389 = vunpack.c.l.b16 %v350
  %v390 = vpack.c.b16 %v375, %v374
  %v391 = vpack.c.b16 %v377, %v376
  %v392 = vpack.c.b16 %v379, %v378
  %v393 = vpack.c.b16 %v381, %v380
  %v394 = vpack.c.b16 %v383, %v382
  %v395 = vpack.c.b16 %v385, %v384
  %v396 = vpack.c.b16 %v387, %v386
  %v397 = vpack.c.b16 %v389, %v388
  %406 = vmatprep.subr.bf16.mxu0 0
  %407 = vmatpush1.bf16.msra.mxu0 %v390
  %408 = vmatprep.subr.bf16.mxu0 0
  %409 = vmatpush1.bf16.msra.mxu0 %v391
  %410 = vmatprep.subr.bf16.mxu0 0
  %411 = vmatpush1.bf16.msra.mxu0 %v392
  %412 = vmatprep.subr.bf16.mxu0 0
  %413 = vmatpush1.bf16.msra.mxu0 %v393
  %414 = vmatprep.subr.bf16.mxu0 0
  %415 = vmatpush1.bf16.msra.mxu0 %v394
  %416 = vmatprep.subr.bf16.mxu0 0
  %417 = vmatpush1.bf16.msra.mxu0 %v395
  %418 = vmatprep.subr.bf16.mxu0 0
  %419 = vmatpush1.bf16.msra.mxu0 %v396
  %420 = vmatprep.subr.bf16.mxu0 0
  %421 = vmatpush1.bf16.msra.mxu0 %v397
  %422 = vmatprep.subr.bf16.mxu0 0
  %423 = vmatpush1.bf16.msra.mxu0 0
  %424 = vmatprep.subr.bf16.mxu0 0
  %425 = vmatpush1.bf16.msra.mxu0 0
  %426 = vmatprep.subr.bf16.mxu0 0
  %427 = vmatpush1.bf16.msra.mxu0 0
  %428 = vmatprep.subr.bf16.mxu0 0
  %429 = vmatpush1.bf16.msra.mxu0 0
  %430 = vmatprep.subr.bf16.mxu0 0
  %431 = vmatpush1.bf16.msra.mxu0 0
  %432 = vmatprep.subr.bf16.mxu0 0
  %433 = vmatpush1.bf16.msra.mxu0 0
  %434 = vmatprep.subr.bf16.mxu0 0
  %435 = vmatpush1.bf16.msra.mxu0 0
  %436 = vmatprep.subr.bf16.mxu0 0
  %437 = vmatpush1.bf16.msra.mxu0 0
  %438 = vmatprep.mubr.bf16.mxu0 0
  %439 = vmatmul.mubr.bf16.gmra.mrb[0].mxu0 %v331
  %v440 = vpop.f32.mrb[0].mxu0
  %v441 = vadd.f32 %v356, %v440
  %v442 = vpop.f32.mrb[0].mxu0
  %v443 = vpop.f32.mrb[0].mxu0
  %v444 = vadd.f32 %v356, %v443
  %v445 = vpop.f32.mrb[0].mxu0
  %446 = vmatprep.mubr.bf16.mxu0 0
  %447 = vmatmul.mubr.bf16.gmra.mrb[0].mxu0 %v332
  %v448 = vpop.f32.mrb[0].mxu0
  %v449 = vadd.f32 %v356, %v448
  %v450 = vpop.f32.mrb[0].mxu0
  %v451 = vpop.f32.mrb[0].mxu0
  %v452 = vadd.f32 %v356, %v451
  %v453 = vpop.f32.mrb[0].mxu0
  %454 = vmatprep.mubr.bf16.mxu0 0
  %455 = vmatmul.mubr.bf16.gmra.mrb[0].mxu0 %v333
  %v456 = vpop.f32.mrb[0].mxu0
  %v457 = vadd.f32 %v356, %v456
  %v458 = vpop.f32.mrb[0].mxu0
  %v459 = vpop.f32.mrb[0].mxu0
  %v460 = vadd.f32 %v356, %v459
  %v461 = vpop.f32.mrb[0].mxu0
  %462 = vmatprep.mubr.bf16.mxu0 0
  %463 = vmatmul.mubr.bf16.gmra.mrb[0].mxu0 %v334
  %v464 = vpop.f32.mrb[0].mxu0
  %v465 = vadd.f32 %v356, %v464
  %v466 = vpop.f32.mrb[0].mxu0
  %v467 = vpop.f32.mrb[0].mxu0
  %v468 = vadd.f32 %v356, %v467
  %v469 = vpop.f32.mrb[0].mxu0
  %470 = vdwg.mxu0
  %v471 = vmax.f32 %v441, 0.0
  %v472 = vmax.f32 %v444, 0.0
  %v473 = vmax.f32 %v449, 0.0
  %v474 = vmax.f32 %v452, 0.0
  %v475 = vmax.f32 %v457, 0.0
  %v476 = vmax.f32 %v460, 0.0
  %v477 = vmax.f32 %v465, 0.0
  %v478 = vmax.f32 %v468, 0.0
  %479 = vst [vmem:[%s7] sm:$0xff] %v471
  %480 = vst [vmem:[%s7 + $0x8] sm:$0xff] %v472
  %481 = vst [vmem:[%s7 + $0x10] sm:$0xff] %v473
  %482 = vst [vmem:[%s7 + $0x18] sm:$0xff] %v474
  %483 = vst [vmem:[%s7 + $0x20] sm:$0xff] %v475
  %484 = vst [vmem:[%s7 + $0x28] sm:$0xff] %v476
  %485 = vst [vmem:[%s7 + $0x30] sm:$0xff] %v477
  %486 = vst [vmem:[%s7 + $0x38] sm:$0xff] %v478
  // Predicated region
  $region30: #{encoder_forward.1} parent=0 // pred_check
    _
  $region31: #{encoder_forward.1} parent=0 // pred_check_branch
    %488 = sbr.rel (0) target = $region33
  $region32: #{encoder_forward.1} parent=0 // pred_region
    _
  $region33: #{encoder_forward.1} parent=0 // pred_fallthru
    _
  // Predicated region
  $region34: #{encoder_forward.1} parent=0 // pred_check
    _
  $region35: #{encoder_forward.1} parent=0 // pred_check_branch
    %490 = sbr.rel (0) target = $region37
  $region36: #{encoder_forward.1} parent=0 // pred_region
    _
  $region37: #{encoder_forward.1} parent=0 // pred_fallthru
    _

</llo_original>
